<compile_context>
chip_gen: v7x
topology: tpu7x:2x2x1
jax: 0.10.0
libtpu: 0.0.40
codegen_flags: <defaults>
</compile_context>

<pallas_src>
import math
from functools import partial

import jax
import jax.numpy as jnp
from jax.experimental import pallas as pl
from jax.experimental.pallas import tpu as pltpu

BN_EPS = 1e-5
_VMEM_LIMIT = 32 * 1024 * 1024   # scoped-VMEM raise, safe on v5e/v6e/v7x
_VMEM_BUDGET = 16 * 1024 * 1024  # live bytes for (double-buffered) in+out blocks


def _pad8(c):
    return ((max(c, 1) + 7) // 8) * 8


def _block_bytes(nb, t, cin, cout):
    # f32 tiles, sublane-padded channels, input + output, double-buffered.
    return nb * t * 4 * (_pad8(cin) + _pad8(cout)) * 2


def _divisors(v):
    ds = set()
    i = 1
    while i * i <= v:
        if v % i == 0:
            ds.add(i)
            ds.add(v // i)
        i += 1
    return ds


def _pick_blocks(n, cin, cout, hw_p):
    """Pick (batch-block Nb, spatial tile T): largest lane-dense blocks that fit
    the VMEM byte budget. hw_p is already a multiple of 128."""
    cands = sorted(
        {d for d in _divisors(hw_p) if d % 128 == 0 or d == hw_p}, reverse=True
    )
    t = cands[-1]
    for d in cands:
        if _block_bytes(1, d, cin, cout) <= _VMEM_BUDGET:
            t = d
            break
    nb = 1
    for d in sorted(_divisors(n), reverse=True):
        if _block_bytes(d, t, cin, cout) <= _VMEM_BUDGET:
            nb = d
            break
    return nb, t


def _stats_kernel(x_ref, s_ref, g_ref, *, nb):
    """Pass 1: pure streaming read of x.

    x_ref: [Nb, Cin, T]; s_ref: [Cin, 1], g_ref: [Cin, Cin] resident
    accumulators (one pair per batch-block -> grid axis 0 stays parallel).
    """
    @pl.when(pl.program_id(1) == 0)
    def _():
        s_ref[...] = jnp.zeros_like(s_ref)
        g_ref[...] = jnp.zeros_like(g_ref)

    for b in range(nb):  # tiny static unroll over the batch block
        xb = x_ref[b].astype(jnp.float32)                   # [Cin, T]
        s_ref[...] += jnp.sum(xb, axis=1, keepdims=True)    # [Cin, 1]
        # Gram matrix xb @ xb^T: contraction over the big spatial dim (MXU).
        g_ref[...] += jax.lax.dot_general(
            xb, xb, (((1,), (1,)), ((), ())),
            preferred_element_type=jnp.float32)


def _apply_kernel(x_ref, w_ref, shift_ref, o_ref, *, nb, cin):
    """Pass 2: o = relu((scale*W) @ x + shift); BN scale already folded into W."""
    w = w_ref[...]            # [Cout, Cin] f32 (scale pre-folded)
    shift = shift_ref[...]    # [Cout, 1]  f32
    for b in range(nb):       # tiny static unroll over the batch block
        x = x_ref[b].astype(jnp.float32)                    # [Cin, T]
        # K = Cin is tiny (e.g. 4): unrolled broadcast FMAs on the VPU.
        acc = w[:, 0:1] * x[0:1, :]
        for c in range(1, cin):
            acc = acc + w[:, c:c + 1] * x[c:c + 1, :]
        o_ref[b] = jnp.maximum(acc + shift, 0.0).astype(o_ref.dtype)


def conv_bn_relu(x_nchw, weight, gamma, beta):
    """x_nchw: [N, Cin, H, W]; weight: [Cout, Cin, 1, 1]; gamma/beta: [Cout]."""
    n, cin, h, w = x_nchw.shape
    cout = weight.shape[0]
    hw = h * w

    x3 = x_nchw.reshape(n, cin, hw)                  # free reshape, stays NCHW
    w_mat = weight.reshape(cout, cin).astype(jnp.float32)

    # Lane-dense spatial axis: pad H*W up to a multiple of 128. Zero padding
    # does not perturb the batch statistics (zeros contribute nothing to S/G,
    # and the element count below uses the true H*W); padded output columns
    # are sliced off at the end.
    hw_p = ((hw + 127) // 128) * 128
    if hw_p != hw:
        x3 = jnp.pad(x3, ((0, 0), (0, 0), (0, hw_p - hw)))

    nb, t = _pick_blocks(n, cin, cout, hw_p)
    n_bb = n // nb
    n_t = hw_p // t

    # ---- Pass 1: per-channel input sums + Gram matrix (per batch-block).
    s_parts, g_parts = pl.pallas_call(
        partial(_stats_kernel, nb=nb),
        out_shape=(
            jax.ShapeDtypeStruct((n_bb, cin, 1), jnp.float32),
            jax.ShapeDtypeStruct((n_bb, cin, cin), jnp.float32),
        ),
        grid=(n_bb, n_t),
        in_specs=[pl.BlockSpec((nb, cin, t), lambda b, s: (b, 0, s))],
        out_specs=(
            pl.BlockSpec((None, cin, 1), lambda b, s: (b, 0, 0)),
            pl.BlockSpec((None, cin, cin), lambda b, s: (b, 0, 0)),
        ),
        compiler_params=pltpu.CompilerParams(
            dimension_semantics=("parallel", "arbitrary"),
            vmem_limit_bytes=_VMEM_LIMIT,
        ),
    )(x3)

    # ---- Tiny [Cout]-sized BN fold in plain JAX.
    s = jnp.sum(s_parts, axis=0)                      # [Cin, 1]
    g = jnp.sum(g_parts, axis=0)                      # [Cin, Cin]
    m_total = jnp.float32(n * hw)                     # true (unpadded) count
    mean = (w_mat @ s) / m_total                      # [Cout, 1]
    e2 = (jnp.einsum("oc,cd,od->o", w_mat, g, w_mat) / m_total)[:, None]
    var = jnp.maximum(e2 - mean * mean, 0.0)
    inv_std = jax.lax.rsqrt(var + BN_EPS)
    scale = gamma.reshape(cout, 1).astype(jnp.float32) * inv_std
    shift = beta.reshape(cout, 1).astype(jnp.float32) - mean * scale
    w_scaled = scale * w_mat                          # fold BN scale into weight

    # ---- Pass 2: y = relu(w_scaled @ x + shift), fully parallel grid.
    out3 = pl.pallas_call(
        partial(_apply_kernel, nb=nb, cin=cin),
        out_shape=jax.ShapeDtypeStruct((n, cout, hw_p), x_nchw.dtype),
        grid=(n_bb, n_t),
        in_specs=[
            pl.BlockSpec((nb, cin, t), lambda b, s: (b, 0, s)),
            pl.BlockSpec((cout, cin), lambda b, s: (0, 0)),
            pl.BlockSpec((cout, 1), lambda b, s: (0, 0)),
        ],
        out_specs=pl.BlockSpec((nb, cout, t), lambda b, s: (b, 0, s)),
        compiler_params=pltpu.CompilerParams(
            dimension_semantics=("parallel", "parallel"),
            vmem_limit_bytes=_VMEM_LIMIT,
        ),
    )(x3, w_scaled, shift)

    if hw_p != hw:
        out3 = out3[:, :, :hw]
    return out3.reshape(n, cout, h, w)


if __name__ == "__main__":
    key = jax.random.PRNGKey(0)
    k_x, k_w = jax.random.split(key)

    # Small shapes consistent with the module: in_planes=4, out_planes=8.
    N, Cin, H, W = 2, 4, 16, 16
    Cout, KS = 8, 1

    x = jax.random.normal(k_x, (N, Cin, H, W), dtype=jnp.float32)

    # Conv weight init: normal(0, sqrt(2 / (k*k*out_planes))), as in __init__.
    std = math.sqrt(2.0 / (KS * KS * Cout))
    weight = std * jax.random.normal(k_w, (Cout, Cin, KS, KS), dtype=jnp.float32)

    # BatchNorm init: weight (gamma) = 1, bias (beta) = 0.
    gamma = jnp.ones((Cout,), dtype=jnp.float32)
    beta = jnp.zeros((Cout,), dtype=jnp.float32)

    out = conv_bn_relu(x, weight, gamma, beta)
    jax.block_until_ready(out)

    # Sanity-check against a plain-JAX reference (training-mode BN semantics).
    y_ref = jnp.einsum("nchw,oc->nohw", x, weight.reshape(Cout, Cin))
    mu = y_ref.mean(axis=(0, 2, 3), keepdims=True)
    var = ((y_ref - mu) ** 2).mean(axis=(0, 2, 3), keepdims=True)
    ref = jnp.maximum(
        gamma.reshape(1, Cout, 1, 1) * (y_ref - mu) / jnp.sqrt(var + BN_EPS)
        + beta.reshape(1, Cout, 1, 1),
        0.0,
    )
    assert jnp.allclose(out, ref, atol=1e-4, rtol=1e-4), float(
        jnp.max(jnp.abs(out - ref))
    )

    print("KERNEL_OK")
</pallas_src>

<mosaic_0001>
module attributes {stable_mosaic.version = 11 : i64} {
  func.func @_stats_kernel(%arg0: i32, %arg1: i32, %arg2: memref<2x4x256xf32, #tpu.memory_space<vmem>>, %arg3: memref<1x4x1xf32, #tpu.memory_space<vmem>>, %arg4: memref<1x4x4xf32, #tpu.memory_space<vmem>>) attributes {dimension_semantics = [#tpu.dimension_semantics<parallel>, #tpu.dimension_semantics<arbitrary>], iteration_bounds = array<i64: 1, 1>, scalar_prefetch = 0 : i64, scratch_operands = 0 : i64, tpu.core_type = #tpu.core_type<tc>, window_params = [{transform_indices = @transform_0, window_bounds = array<i64: 2, 4, 256>}, {transform_indices = @transform_1, window_bounds = array<i64: 1, 4, 1>}, {transform_indices = @transform_2, window_bounds = array<i64: 1, 4, 4>}]} {
    %c0_i32 = arith.constant 0 : i32
    %0 = arith.cmpi eq, %arg1, %c0_i32 : i32
    %1 = arith.extui %0 : i1 to i32
    %c0_i32_0 = arith.constant 0 : i32
    %2 = arith.cmpi ne, %1, %c0_i32_0 : i32
    scf.if %2 {
      %cst_32 = arith.constant 0.000000e+00 : f32
      %37 = vector.broadcast %cst_32 : f32 to vector<4x1xf32>
      %c0_33 = arith.constant 0 : index
      %c0_34 = arith.constant 0 : index
      %c0_35 = arith.constant 0 : index
      %38 = vector.load %arg3[%c0_33, %c0_34, %c0_35] : memref<1x4x1xf32, #tpu.memory_space<vmem>>, vector<1x4x1xf32>
      %39 = vector.shape_cast %38 : vector<1x4x1xf32> to vector<4x1xf32>
      %40 = vector.shape_cast %37 : vector<4x1xf32> to vector<1x4x1xf32>
      tpu.vector_store %arg3[%c0_33, %c0_34, %c0_35], %40 {strides = array<i32>} : memref<1x4x1xf32, #tpu.memory_space<vmem>>, vector<1x4x1xf32>,
      %cst_36 = arith.constant 0.000000e+00 : f32
      %41 = vector.broadcast %cst_36 : f32 to vector<4x4xf32>
      %c0_37 = arith.constant 0 : index
      %c0_38 = arith.constant 0 : index
      %c0_39 = arith.constant 0 : index
      %42 = vector.load %arg4[%c0_37, %c0_38, %c0_39] : memref<1x4x4xf32, #tpu.memory_space<vmem>>, vector<1x4x4xf32>
      %43 = vector.shape_cast %42 : vector<1x4x4xf32> to vector<4x4xf32>
      %44 = vector.shape_cast %41 : vector<4x4xf32> to vector<1x4x4xf32>
      tpu.vector_store %arg4[%c0_37, %c0_38, %c0_39], %44 {strides = array<i32>} : memref<1x4x4xf32, #tpu.memory_space<vmem>>, vector<1x4x4xf32>,
    } else {
    }
    %c0 = arith.constant 0 : index
    %c0_1 = arith.constant 0 : index
    %c0_2 = arith.constant 0 : index
    %3 = vector.load %arg2[%c0, %c0_1, %c0_2] : memref<2x4x256xf32, #tpu.memory_space<vmem>>, vector<1x4x256xf32>
    %4 = vector.shape_cast %3 : vector<1x4x256xf32> to vector<4x256xf32>
    %c0_3 = arith.constant 0 : index
    %c0_4 = arith.constant 0 : index
    %c0_5 = arith.constant 0 : index
    %5 = vector.load %arg3[%c0_3, %c0_4, %c0_5] : memref<1x4x1xf32, #tpu.memory_space<vmem>>, vector<1x4x1xf32>
    %6 = vector.shape_cast %5 : vector<1x4x1xf32> to vector<4x1xf32>
    %cst = arith.constant dense<0.000000e+00> : vector<4xf32>
    %7 = vector.multi_reduction <add>, %4, %cst [1] : vector<4x256xf32> to vector<4xf32>
    %8 = vector.shape_cast %7 : vector<4xf32> to vector<4x1xf32>
    %9 = arith.addf %6, %8 : vector<4x1xf32>
    %c0_6 = arith.constant 0 : index
    %c0_7 = arith.constant 0 : index
    %c0_8 = arith.constant 0 : index
    %10 = vector.load %arg3[%c0_6, %c0_7, %c0_8] : memref<1x4x1xf32, #tpu.memory_space<vmem>>, vector<1x4x1xf32>
    %11 = vector.shape_cast %10 : vector<1x4x1xf32> to vector<4x1xf32>
    %12 = vector.shape_cast %9 : vector<4x1xf32> to vector<1x4x1xf32>
    tpu.vector_store %arg3[%c0_6, %c0_7, %c0_8], %12 {strides = array<i32>} : memref<1x4x1xf32, #tpu.memory_space<vmem>>, vector<1x4x1xf32>,
    %c0_9 = arith.constant 0 : index
    %c0_10 = arith.constant 0 : index
    %c0_11 = arith.constant 0 : index
    %13 = vector.load %arg4[%c0_9, %c0_10, %c0_11] : memref<1x4x4xf32, #tpu.memory_space<vmem>>, vector<1x4x4xf32>
    %14 = vector.shape_cast %13 : vector<1x4x4xf32> to vector<4x4xf32>
    %cst_12 = arith.constant dense<0.000000e+00> : vector<4x4xf32>
    %15 = tpu.matmul %4, %4, %cst_12 {dimension_numbers = #tpu.dot_dimension_numbers<[1], [1], [0], [0], [0, 0, 1, 0], [], []>} : vector<4x256xf32>, vector<4x256xf32>, vector<4x4xf32> -> vector<4x4xf32>
    %16 = arith.addf %14, %15 : vector<4x4xf32>
    %c0_13 = arith.constant 0 : index
    %c0_14 = arith.constant 0 : index
    %c0_15 = arith.constant 0 : index
    %17 = vector.load %arg4[%c0_13, %c0_14, %c0_15] : memref<1x4x4xf32, #tpu.memory_space<vmem>>, vector<1x4x4xf32>
    %18 = vector.shape_cast %17 : vector<1x4x4xf32> to vector<4x4xf32>
    %19 = vector.shape_cast %16 : vector<4x4xf32> to vector<1x4x4xf32>
    tpu.vector_store %arg4[%c0_13, %c0_14, %c0_15], %19 {strides = array<i32>} : memref<1x4x4xf32, #tpu.memory_space<vmem>>, vector<1x4x4xf32>,
    %c1 = arith.constant 1 : index
    %c0_16 = arith.constant 0 : index
    %c0_17 = arith.constant 0 : index
    %20 = vector.load %arg2[%c1, %c0_16, %c0_17] : memref<2x4x256xf32, #tpu.memory_space<vmem>>, vector<1x4x256xf32>
    %21 = vector.shape_cast %20 : vector<1x4x256xf32> to vector<4x256xf32>
    %c0_18 = arith.constant 0 : index
    %c0_19 = arith.constant 0 : index
    %c0_20 = arith.constant 0 : index
    %22 = vector.load %arg3[%c0_18, %c0_19, %c0_20] : memref<1x4x1xf32, #tpu.memory_space<vmem>>, vector<1x4x1xf32>
    %23 = vector.shape_cast %22 : vector<1x4x1xf32> to vector<4x1xf32>
    %cst_21 = arith.constant dense<0.000000e+00> : vector<4xf32>
    %24 = vector.multi_reduction <add>, %21, %cst_21 [1] : vector<4x256xf32> to vector<4xf32>
    %25 = vector.shape_cast %24 : vector<4xf32> to vector<4x1xf32>
    %26 = arith.addf %23, %25 : vector<4x1xf32>
    %c0_22 = arith.constant 0 : index
    %c0_23 = arith.constant 0 : index
    %c0_24 = arith.constant 0 : index
    %27 = vector.load %arg3[%c0_22, %c0_23, %c0_24] : memref<1x4x1xf32, #tpu.memory_space<vmem>>, vector<1x4x1xf32>
    %28 = vector.shape_cast %27 : vector<1x4x1xf32> to vector<4x1xf32>
    %29 = vector.shape_cast %26 : vector<4x1xf32> to vector<1x4x1xf32>
    tpu.vector_store %arg3[%c0_22, %c0_23, %c0_24], %29 {strides = array<i32>} : memref<1x4x1xf32, #tpu.memory_space<vmem>>, vector<1x4x1xf32>,
    %c0_25 = arith.constant 0 : index
    %c0_26 = arith.constant 0 : index
    %c0_27 = arith.constant 0 : index
    %30 = vector.load %arg4[%c0_25, %c0_26, %c0_27] : memref<1x4x4xf32, #tpu.memory_space<vmem>>, vector<1x4x4xf32>
    %31 = vector.shape_cast %30 : vector<1x4x4xf32> to vector<4x4xf32>
    %cst_28 = arith.constant dense<0.000000e+00> : vector<4x4xf32>
    %32 = tpu.matmul %21, %21, %cst_28 {dimension_numbers = #tpu.dot_dimension_numbers<[1], [1], [0], [0], [0, 0, 1, 0], [], []>} : vector<4x256xf32>, vector<4x256xf32>, vector<4x4xf32> -> vector<4x4xf32>
    %33 = arith.addf %31, %32 : vector<4x4xf32>
    %c0_29 = arith.constant 0 : index
    %c0_30 = arith.constant 0 : index
    %c0_31 = arith.constant 0 : index
    %34 = vector.load %arg4[%c0_29, %c0_30, %c0_31] : memref<1x4x4xf32, #tpu.memory_space<vmem>>, vector<1x4x4xf32>
    %35 = vector.shape_cast %34 : vector<1x4x4xf32> to vector<4x4xf32>
    %36 = vector.shape_cast %33 : vector<4x4xf32> to vector<1x4x4xf32>
    tpu.vector_store %arg4[%c0_29, %c0_30, %c0_31], %36 {strides = array<i32>} : memref<1x4x4xf32, #tpu.memory_space<vmem>>, vector<1x4x4xf32>,
    return
  }
  func.func @transform_0(%arg0: i32, %arg1: i32) -> (i32, i32, i32) {
    %c0_i32 = arith.constant 0 : i32
    %c0_i32_0 = arith.constant 0 : i32
    return %arg0, %c0_i32, %arg1 : i32, i32, i32
  }
  func.func @transform_1(%arg0: i32, %arg1: i32) -> (i32, i32, i32) {
    %c0_i32 = arith.constant 0 : i32
    %c0_i32_0 = arith.constant 0 : i32
    %c0_i32_1 = arith.constant 0 : i32
    return %arg0, %c0_i32, %c0_i32_0 : i32, i32, i32
  }
  func.func @transform_2(%arg0: i32, %arg1: i32) -> (i32, i32, i32) {
    %c0_i32 = arith.constant 0 : i32
    %c0_i32_0 = arith.constant 0 : i32
    %c0_i32_1 = arith.constant 0 : i32
    return %arg0, %c0_i32, %c0_i32_0 : i32, i32, i32
  }
}

</mosaic_0001>

<llo_original>
// kernel: tpu_custom_call.1
$region0: #{tpu_custom_call.1}
  #allocation0 [shape = 'u32[]', space=smem, size = 0x4, offset = 0x4, fixed_abs, tag = 'smem constant byte address 0x4 - core index']
  #allocation1 [shape = 'u32[144,128]{1,0:T(1,128)}', space=vmem, size = 0x12000, scoped, tag = 'internal scratch']
  %s0 = inlined_call_operand.hbm [shape: f32[2,4,256], index: 0, kind: input, shape index: {}]
  %s1 = inlined_call_operand.vmem [shape: f32[1,4,1], index: 1, kind: output, shape index: {0}]
  %s2 = inlined_call_operand.hbm [shape: f32[1,4,4], index: 2, kind: output, shape index: {1}]
  %3 = xla_tuple %s1, %s2
  %s4 = sld [smem:[#allocation0]]
  $region30: #{tpu_custom_call.1} parent=0
    _
  %s6 = ssub.s32 1, %s4
  %s7 = scalar_select 0, %s6, %s4
  $region1: #{tpu_custom_call.1} parent=0
    #allocation2 [shape = 'u8[8192]{0}', space=vmem, size = 0x2000, scoped, tag = 'input window, operand 0, single buffered']
    #allocation3 [shape = 's32[1]{0}', space=sflag, size = 0x4, scoped, tag = 'scoped memory for tpu_custom_call.1']
    #allocation4 [shape = 's32[1]{0}', space=sflag, size = 0x4, scoped, tag = 'scoped memory for tpu_custom_call.1']
    #allocation5 [shape = 'u8[2048]{0}', space=vmem, size = 0x800, scoped, tag = 'output window, operand 1, single buffered']
    %8 = vsyncpa [#allocation3], 0
    %9 = vsyncpa [#allocation4], 0
    // Predicated region
    $region2: #{tpu_custom_call.1} parent=1 // pred_check
      _
    $region3: #{tpu_custom_call.1} parent=1 // pred_check_branch
      %11 = sbr.rel (0) target = $region5
    $region4: #{tpu_custom_call.1} parent=1 // pred_region
      %s13 = ssub.s32 256, 256
      %14 = vsyncadd [#allocation3], %s13
      %s15 = sshll.u32 [#allocation2], 4
      %s16 = int_to_ptr.vmem [resolvable:$true] %s15
      %21 = dma.hbm_to_vmem [thread:$0]  %s0, 256, %s16, [#allocation3], 128, 128, 8
    $region5: #{tpu_custom_call.1} parent=1 // pred_fallthru
      _
    // Predicated region
    $region6: #{tpu_custom_call.1} parent=1 // pred_check
      _
    $region7: #{tpu_custom_call.1} parent=1 // pred_check_branch
      %23 = sbr.rel (0) target = $region9
    $region8: #{tpu_custom_call.1} parent=1 // pred_region
      %24 = dma.done [#allocation3], 256
    $region9: #{tpu_custom_call.1} parent=1 // pred_fallthru
      _
    %p25 = scmp.eq.s32.totalorder 0, 0
    // Predicated region
    $region10: #{tpu_custom_call.1} parent=1 // pred_check
      %p26 = pneg %p25
    $region11: #{tpu_custom_call.1} parent=1 // pred_check_branch
      %28 = sbr.rel (%p26) target = $region13
    $region12: #{tpu_custom_call.1} parent=1 // pred_region
      %vm29 = vcmask 3072
      %30 = vst.msk [vmem:[%s1] sm:$0xf] %vm29, 0.0
      %vm31 = vcmask 27648
      %32 = vst.msk [vmem:[#allocation5] sm:$0xf] %vm31, 0.0
    $region13: #{tpu_custom_call.1} parent=1 // pred_fallthru
      _
    %v33 = vld [vmem:[#allocation2] sm:$0xff]
    %v34 = vld [vmem:[%s1] sm:$0xf]
    %v36 = vcombine.high %v33, %v33
    %vm38 = vcmask 1043456
    %v39 = vsel %vm38, %v33, 0.0
    %v40 = vsel %vm38, %v36, 0.0
    %v41 = vadd.f32 %v39, %v40
    %42 = vadd.xlane.f32.xlu0 %v41
    %v43 = vpop.xlane.xlu0 %42
    %v44 = vadd.f32 %v34, %v43
    %vm45 = vcmask 3072
    %46 = vst.msk [vmem:[%s1] sm:$0xf] %vm45, %v44
    %v47 = vld [vmem:[#allocation5] sm:$0xf]
    %48 = vmatprep.subr.mxu0 %v36
    %49 = vmatpush1.xpose.msra.mxu0 %v33
    %50 = vmatprep.subr.mxu0 0.0
    %51 = vmatpush1.xpose.msra.mxu0 0.0
    %52 = vmatprep.subr.mxu0 0.0
    %53 = vmatpush1.xpose.msra.mxu0 0.0
    %54 = vmatprep.subr.mxu0 0.0
    %55 = vmatpush1.xpose.msra.mxu0 0.0
    %56 = vmatprep.subr.mxu0 0.0
    %57 = vmatpush1.xpose.msra.mxu0 0.0
    %58 = vmatprep.subr.mxu0 0.0
    %59 = vmatpush1.xpose.msra.mxu0 0.0
    %60 = vmatprep.subr.mxu0 0.0
    %61 = vmatpush1.xpose.msra.mxu0 0.0
    %62 = vmatprep.subr.mxu0 0.0
    %63 = vmatpush1.xpose.msra.mxu0 0.0
    %64 = vmatprep.subr.mxu0 0.0
    %65 = vmatpush1.xpose.msra.mxu0 0.0
    %66 = vmatprep.subr.mxu0 0.0
    %67 = vmatpush1.xpose.msra.mxu0 0.0
    %68 = vmatprep.subr.mxu0 0.0
    %69 = vmatpush1.xpose.msra.mxu0 0.0
    %70 = vmatprep.subr.mxu0 0.0
    %71 = vmatpush1.xpose.msra.mxu0 0.0
    %72 = vmatprep.subr.mxu0 0.0
    %73 = vmatpush1.xpose.msra.mxu0 0.0
    %74 = vmatprep.subr.mxu0 0.0
    %75 = vmatpush1.xpose.msra.mxu0 0.0
    %76 = vmatprep.subr.mxu0 0.0
    %77 = vmatpush1.xpose.msra.mxu0 0.0
    %78 = vmatprep.subr.mxu0 0.0
    %79 = vmatpush1.xpose.msra.mxu0 0.0
    %80 = vmatprep.subr.mxu0 0.0
    %81 = vmatpush1.xpose.msra.mxu0 0.0
    %82 = vmatprep.subr.mxu0 0.0
    %83 = vmatpush1.xpose.msra.mxu0 0.0
    %84 = vmatprep.subr.mxu0 0.0
    %85 = vmatpush1.xpose.msra.mxu0 0.0
    %86 = vmatprep.subr.mxu0 0.0
    %87 = vmatpush1.xpose.msra.mxu0 0.0
    %88 = vmatprep.subr.mxu0 0.0
    %89 = vmatpush1.xpose.msra.mxu0 0.0
    %90 = vmatprep.subr.mxu0 0.0
    %91 = vmatpush1.xpose.msra.mxu0 0.0
    %92 = vmatprep.subr.mxu0 0.0
    %93 = vmatpush1.xpose.msra.mxu0 0.0
    %94 = vmatprep.subr.mxu0 0.0
    %95 = vmatpush1.xpose.msra.mxu0 0.0
    %96 = vmatprep.subr.mxu0 0.0
    %97 = vmatpush1.xpose.msra.mxu0 0.0
    %98 = vmatprep.subr.mxu0 0.0
    %99 = vmatpush1.xpose.msra.mxu0 0.0
    %100 = vmatprep.subr.mxu0 0.0
    %101 = vmatpush1.xpose.msra.mxu0 0.0
    %102 = vmatprep.subr.mxu0 0.0
    %103 = vmatpush1.xpose.msra.mxu0 0.0
    %104 = vmatprep.subr.mxu0 0.0
    %105 = vmatpush1.xpose.msra.mxu0 0.0
    %106 = vmatprep.subr.mxu0 0.0
    %107 = vmatpush1.xpose.msra.mxu0 0.0
    %108 = vmatprep.subr.mxu0 0.0
    %109 = vmatpush1.xpose.msra.mxu0 0.0
    %110 = vmatprep.subr.mxu0 0.0
    %111 = vmatpush1.xpose.msra.mxu0 0.0
    %112 = vmatprep.mubr.f32.mxu0 %v36
    %113 = vmatmul.mubr.f32.gmra.mrb[0].mxu0 %v33
    %v114 = vpop.f32.mrb[0].mxu0
    %v115 = vadd.f32 0.0, %v114
    %v116 = vpop.f32.mrb[0].mxu0
    %117 = vdwg.mxu0
    %v118 = vadd.f32 %v47, %v115
    %vm119 = vcmask 27648
    %120 = vst.msk [vmem:[#allocation5] sm:$0xf] %vm119, %v118
    %s121 = scalar_lea.vmem [#allocation2], 8
    %v122 = vld [vmem:[%s121] sm:$0xff]
    %v123 = vld [vmem:[%s1] sm:$0xf]
    %v125 = vcombine.high %v122, %v122
    %v127 = vsel %vm38, %v122, 0.0
    %v128 = vsel %vm38, %v125, 0.0
    %v129 = vadd.f32 %v127, %v128
    %130 = vadd.xlane.f32.xlu0 %v129
    %v131 = vpop.xlane.xlu0 %130
    %v132 = vadd.f32 %v123, %v131
    %133 = vst.msk [vmem:[%s1] sm:$0xf] %vm45, %v132
    %v134 = vld [vmem:[#allocation5] sm:$0xf]
    %135 = vmatprep.subr.mxu0 %v125
    %136 = vmatpush1.xpose.msra.mxu0 %v122
    %137 = vmatprep.subr.mxu0 0.0
    %138 = vmatpush1.xpose.msra.mxu0 0.0
    %139 = vmatprep.subr.mxu0 0.0
    %140 = vmatpush1.xpose.msra.mxu0 0.0
    %141 = vmatprep.subr.mxu0 0.0
    %142 = vmatpush1.xpose.msra.mxu0 0.0
    %143 = vmatprep.subr.mxu0 0.0
    %144 = vmatpush1.xpose.msra.mxu0 0.0
    %145 = vmatprep.subr.mxu0 0.0
    %146 = vmatpush1.xpose.msra.mxu0 0.0
    %147 = vmatprep.subr.mxu0 0.0
    %148 = vmatpush1.xpose.msra.mxu0 0.0
    %149 = vmatprep.subr.mxu0 0.0
    %150 = vmatpush1.xpose.msra.mxu0 0.0
    %151 = vmatprep.subr.mxu0 0.0
    %152 = vmatpush1.xpose.msra.mxu0 0.0
    %153 = vmatprep.subr.mxu0 0.0
    %154 = vmatpush1.xpose.msra.mxu0 0.0
    %155 = vmatprep.subr.mxu0 0.0
    %156 = vmatpush1.xpose.msra.mxu0 0.0
    %157 = vmatprep.subr.mxu0 0.0
    %158 = vmatpush1.xpose.msra.mxu0 0.0
    %159 = vmatprep.subr.mxu0 0.0
    %160 = vmatpush1.xpose.msra.mxu0 0.0
    %161 = vmatprep.subr.mxu0 0.0
    %162 = vmatpush1.xpose.msra.mxu0 0.0
    %163 = vmatprep.subr.mxu0 0.0
    %164 = vmatpush1.xpose.msra.mxu0 0.0
    %165 = vmatprep.subr.mxu0 0.0
    %166 = vmatpush1.xpose.msra.mxu0 0.0
    %167 = vmatprep.subr.mxu0 0.0
    %168 = vmatpush1.xpose.msra.mxu0 0.0
    %169 = vmatprep.subr.mxu0 0.0
    %170 = vmatpush1.xpose.msra.mxu0 0.0
    %171 = vmatprep.subr.mxu0 0.0
    %172 = vmatpush1.xpose.msra.mxu0 0.0
    %173 = vmatprep.subr.mxu0 0.0
    %174 = vmatpush1.xpose.msra.mxu0 0.0
    %175 = vmatprep.subr.mxu0 0.0
    %176 = vmatpush1.xpose.msra.mxu0 0.0
    %177 = vmatprep.subr.mxu0 0.0
    %178 = vmatpush1.xpose.msra.mxu0 0.0
    %179 = vmatprep.subr.mxu0 0.0
    %180 = vmatpush1.xpose.msra.mxu0 0.0
    %181 = vmatprep.subr.mxu0 0.0
    %182 = vmatpush1.xpose.msra.mxu0 0.0
    %183 = vmatprep.subr.mxu0 0.0
    %184 = vmatpush1.xpose.msra.mxu0 0.0
    %185 = vmatprep.subr.mxu0 0.0
    %186 = vmatpush1.xpose.msra.mxu0 0.0
    %187 = vmatprep.subr.mxu0 0.0
    %188 = vmatpush1.xpose.msra.mxu0 0.0
    %189 = vmatprep.subr.mxu0 0.0
    %190 = vmatpush1.xpose.msra.mxu0 0.0
    %191 = vmatprep.subr.mxu0 0.0
    %192 = vmatpush1.xpose.msra.mxu0 0.0
    %193 = vmatprep.subr.mxu0 0.0
    %194 = vmatpush1.xpose.msra.mxu0 0.0
    %195 = vmatprep.subr.mxu0 0.0
    %196 = vmatpush1.xpose.msra.mxu0 0.0
    %197 = vmatprep.subr.mxu0 0.0
    %198 = vmatpush1.xpose.msra.mxu0 0.0
    %199 = vmatprep.mubr.f32.mxu0 %v125
    %200 = vmatmul.mubr.f32.gmra.mrb[0].mxu0 %v122
    %v201 = vpop.f32.mrb[0].mxu0
    %v202 = vadd.f32 0.0, %v201
    %v203 = vpop.f32.mrb[0].mxu0
    %204 = vdwg.mxu0
    %v205 = vadd.f32 %v134, %v202
    %206 = vst.msk [vmem:[#allocation5] sm:$0xf] %vm119, %v205
    // Predicated region
    $region14: #{tpu_custom_call.1} parent=1 // pred_check
      _
    $region15: #{tpu_custom_call.1} parent=1 // pred_check_branch
      %208 = sbr.rel (0) target = $region17
    $region16: #{tpu_custom_call.1} parent=1 // pred_region
      _
    $region17: #{tpu_custom_call.1} parent=1 // pred_fallthru
      _
    // Predicated region
    $region18: #{tpu_custom_call.1} parent=1 // pred_check
      _
    $region19: #{tpu_custom_call.1} parent=1 // pred_check_branch
      %210 = sbr.rel (0) target = $region21
    $region20: #{tpu_custom_call.1} parent=1 // pred_region
      %s212 = ssub.s32 64, 64
      %213 = vsyncadd [#allocation4], %s212
      %s215 = sshll.u32 [#allocation5], 4
      %s216 = int_to_ptr.vmem [resolvable:$true] %s215
      %218 = dma.vmem_to_hbm [thread:$0]  %s216, 64, %s2, [#allocation4]
    $region21: #{tpu_custom_call.1} parent=1 // pred_fallthru
      _
    // Predicated region
    $region22: #{tpu_custom_call.1} parent=1 // pred_check
      _
    $region23: #{tpu_custom_call.1} parent=1 // pred_check_branch
      %220 = sbr.rel (0) target = $region25
    $region24: #{tpu_custom_call.1} parent=1 // pred_region
      _
    $region25: #{tpu_custom_call.1} parent=1 // pred_fallthru
      _
    // Predicated region
    $region26: #{tpu_custom_call.1} parent=1 // pred_check
      _
    $region27: #{tpu_custom_call.1} parent=1 // pred_check_branch
      %222 = sbr.rel (0) target = $region29
    $region28: #{tpu_custom_call.1} parent=1 // pred_region
      %223 = dma.done [#allocation4], 64
    $region29: #{tpu_custom_call.1} parent=1 // pred_fallthru
      _
    %224 = vsyncpa [#allocation3], 1
    %225 = vsyncpa [#allocation4], 1

</llo_original>
